<compile_context>
chip_gen: v7x
topology: tpu7x:2x2x1
jax: 0.10.0
libtpu: 0.0.40
codegen_flags: <defaults>
</compile_context>

<pallas_src>
import functools

import jax
import jax.numpy as jnp
from jax import lax
from jax.experimental import pallas as pl
from jax.experimental.pallas import tpu as pltpu


def node_kernel(x0_ref, x1_ref, wk_ref, b_ref, out_ref, lhs_ref, *, Bt, H):
    """One fat step: conv3x3(x0) + conv1x1(x1) + bias for Bt images, K-fused.

    x0_ref : (Bt*H, W*C) f32   activations for the 3x3 branch (lane-dense rows)
    x1_ref : (Bt*H, W*C) f32   activations for the 1x1 branch
    wk_ref : (4*W*C, W*C) bf16 K-stacked fused weight [wt1; wt3_ky0; wt3_ky1; wt3_ky2]
    b_ref  : (1, W*C) f32      pre-summed bias, tiled over W
    out_ref: (Bt*H, W*C) f32
    lhs_ref: (Bt*H, 4*W*C) f32 VMEM scratch for the K-stacked LHS
    """
    _, WC = x0_ref.shape
    zrow = jnp.zeros((1, WC), dtype=lhs_ref.dtype)

    # Column 0 (K block 0): 1x1-branch rows.
    lhs_ref[:, 0:WC] = x1_ref[...]
    # Column 2 (K block 2, ky=1 center row of the 3x3 kernel): unshifted rows.
    lhs_ref[:, 2 * WC:3 * WC] = x0_ref[...]
    # Columns 1 and 3 (ky=0 / ky=2): rows shifted down / up by one, with the
    # vertical SAME-padding boundary row zeroed in-kernel (no wrapper pad).
    for b in range(Bt):
        r0 = b * H
        # ky=0 reads input row y-1: shift down, zero at the top of each image.
        lhs_ref[r0:r0 + 1, WC:2 * WC] = zrow
        lhs_ref[r0 + 1:r0 + H, WC:2 * WC] = x0_ref[r0:r0 + H - 1, :]
        # ky=2 reads input row y+1: shift up, zero at the bottom of each image.
        lhs_ref[r0:r0 + H - 1, 3 * WC:4 * WC] = x0_ref[r0 + 1:r0 + H, :]
        lhs_ref[r0 + H - 1:r0 + H, 3 * WC:4 * WC] = zrow

    # Single K-fused bf16 MXU matmul with f32 accumulation.
    lhs = lhs_ref[...].astype(jnp.bfloat16)
    acc = jnp.dot(lhs, wk_ref[...], preferred_element_type=jnp.float32)

    # f32 epilogue (bias add + store); unmasked lane-dense vst.
    out_ref[...] = (acc + b_ref[...]).astype(out_ref.dtype)


def build_fused_params(params, W, weight_dtype=jnp.bfloat16):
    """Fold conv weights into one K-stacked lane-dense matrix. Per-update work.

    wt3[ky][jc*C + ci, wx*C + co] = w0[ky, kx, ci, co]  with jc = wx + kx - 1,
      out-of-range jc dropped (== zero SAME padding along W).
    wt1[wx*C + ci, wx*C + co]     = w1[ci, co]           (block diagonal).
    wk = [wt1; wt3[0]; wt3[1]; wt3[2]] stacked along K  -> (4*W*C, W*C).
    """
    w0, b0, w1, b1 = params
    C = w1.shape[0]
    WC = W * C
    wt3 = []
    for ky in range(3):
        m = jnp.zeros((WC, WC), dtype=jnp.float32)
        for kx in range(3):
            # block (row = wx + kx - 1, col = wx) = w0[ky, kx]
            m = m + jnp.kron(jnp.eye(W, k=1 - kx, dtype=jnp.float32),
                             w0[ky, kx].astype(jnp.float32))
        wt3.append(m)
    wt1 = jnp.kron(jnp.eye(W, dtype=jnp.float32), w1.astype(jnp.float32))
    wk = jnp.concatenate([wt1] + wt3, axis=0).astype(weight_dtype)   # (4*WC, WC)
    b_fused = jnp.tile((b0 + b1).reshape(-1), W).reshape(1, WC).astype(jnp.float32)
    return wk, b_fused


def node_forward(states, fused_params, *, batch_tile=None):
    """states: list of NHWC f32 arrays (B, H, W, C). Returns NHWC (B, H, W, C)."""
    wk, b_fused = fused_params
    x0, x1 = states[0], states[1]
    B, H, W, C = x0.shape
    WC = W * C

    # Lane-dense layout assumptions (see TODOs above for the general tiling path).
    assert WC == 128, f"lane-dense layout requires W*C == 128, got {WC}"
    assert H % 8 == 0, f"H must be a multiple of 8, got {H}"

    if batch_tile is None:
        batch_tile = B          # fewest, fattest steps
    assert B % batch_tile == 0
    Bt = batch_tile
    M = Bt * H

    # Free row-major reinterpretations into the lane-dense layout (no pad, no transpose).
    x0_r = x0.reshape(B * H, WC)
    x1_r = x1.reshape(B * H, WC)

    kernel = functools.partial(node_kernel, Bt=Bt, H=H)

    out = pl.pallas_call(
        kernel,
        out_shape=jax.ShapeDtypeStruct((B * H, WC), jnp.float32),
        grid=(B // Bt,),
        in_specs=[
            pl.BlockSpec((M, WC), lambda i: (i, 0)),           # x0 rows
            pl.BlockSpec((M, WC), lambda i: (i, 0)),           # x1 rows
            pl.BlockSpec((4 * WC, WC), lambda i: (0, 0)),      # K-stacked weight
            pl.BlockSpec((1, WC), lambda i: (0, 0)),           # fused bias
        ],
        out_specs=pl.BlockSpec((M, WC), lambda i: (i, 0)),
        scratch_shapes=[pltpu.VMEM((M, 4 * WC), jnp.float32)],  # K-stacked LHS
        compiler_params=pltpu.CompilerParams(
            dimension_semantics=("parallel",)),
    )(x0_r, x1_r, wk, b_fused)

    return out.reshape(B, H, W, C)


def reference_forward(states, params):
    """Pure-JAX reference (mirrors the PyTorch module semantics), NHWC, f32."""
    w0, b0, w1, b1 = params
    x0, x1 = states[0], states[1]
    dn = ("NHWC", "HWIO", "NHWC")
    y0 = lax.conv_general_dilated(x0, w0, (1, 1), "SAME",
                                  dimension_numbers=dn) + b0.reshape(1, 1, 1, -1)
    y1 = lax.conv_general_dilated(x1, w1.reshape(1, 1, *w1.shape), (1, 1),
                                  "VALID", dimension_numbers=dn) + b1.reshape(1, 1, 1, -1)
    return y0 + y1  # sum(stack([...]), dim=0)


if __name__ == "__main__":
    B, C, H, W = 2, 8, 16, 16   # batch=2, in_channels=8, spatial=16  (W*C = 128)

    key = jax.random.PRNGKey(0)
    k0, k1, kw0, kw1 = jax.random.split(key, 4)

    # states produced by preceding nodes / cell inputs (NHWC end-to-end)
    states = [
        jax.random.normal(k0, (B, H, W, C), dtype=jnp.float32),
        jax.random.normal(k1, (B, H, W, C), dtype=jnp.float32),
    ]

    # deterministic parameter init (synthetic; no checkpoint load)
    w0 = jax.random.normal(kw0, (3, 3, C, C), dtype=jnp.float32) * 0.1  # HWIO
    b0 = jnp.arange(C, dtype=jnp.float32) * 0.01
    w1 = jax.random.normal(kw1, (C, C), dtype=jnp.float32) * 0.1        # IO
    b1 = jnp.arange(C, dtype=jnp.float32) * -0.01
    params = (w0, b0, w1, b1)

    # Hoisted: fused-weight construction is per-parameter-update, not per-forward.
    fused = build_fused_params(params, W)

    out = jax.block_until_ready(node_forward(states, fused))
    ref = jax.block_until_ready(reference_forward(states, params))

    assert out.shape == (B, H, W, C), out.shape
    max_err = float(jnp.max(jnp.abs(out - ref)))
    # bf16 MXU operands with f32 accumulation -> loosened tolerance.
    assert jnp.allclose(out, ref, atol=3e-2, rtol=3e-2), max_err

    print("KERNEL_OK")
</pallas_src>

<mosaic_0001>
module attributes {stable_mosaic.version = 11 : i64} {
  func.func @node_kernel(%arg0: i32, %arg1: memref<32x128xf32, #tpu.memory_space<vmem>>, %arg2: memref<32x128xf32, #tpu.memory_space<vmem>>, %arg3: memref<512x128xbf16, #tpu.memory_space<vmem>>, %arg4: memref<1x128xf32, #tpu.memory_space<vmem>>, %arg5: memref<32x128xf32, #tpu.memory_space<vmem>>, %arg6: memref<32x512xf32, #tpu.memory_space<vmem>>) attributes {dimension_semantics = [#tpu.dimension_semantics<parallel>], iteration_bounds = array<i64: 1>, scalar_prefetch = 0 : i64, scratch_operands = 1 : i64, tpu.core_type = #tpu.core_type<tc>, window_params = [{transform_indices = @transform_0, window_bounds = array<i64: 32, 128>}, {transform_indices = @transform_1, window_bounds = array<i64: 32, 128>}, {pipeline_mode = #tpu.pipeline_mode<synchronous>, transform_indices = @transform_2, window_bounds = array<i64: 512, 128>}, {pipeline_mode = #tpu.pipeline_mode<synchronous>, transform_indices = @transform_3, window_bounds = array<i64: 1, 128>}, {transform_indices = @transform_4, window_bounds = array<i64: 32, 128>}]} {
    %cst = arith.constant 0.000000e+00 : f32
    %0 = vector.broadcast %cst : f32 to vector<1x128xf32>
    %c0 = arith.constant 0 : index
    %c0_0 = arith.constant 0 : index
    %1 = vector.load %arg2[%c0, %c0_0] : memref<32x128xf32, #tpu.memory_space<vmem>>, vector<32x128xf32>
    %c0_1 = arith.constant 0 : index
    %c0_2 = arith.constant 0 : index
    %2 = vector.load %arg6[%c0_1, %c0_2] : memref<32x512xf32, #tpu.memory_space<vmem>>, vector<32x128xf32>
    tpu.vector_store %arg6[%c0_1, %c0_2], %1 {strides = array<i32>} : memref<32x512xf32, #tpu.memory_space<vmem>>, vector<32x128xf32>,
    %c0_3 = arith.constant 0 : index
    %c0_4 = arith.constant 0 : index
    %3 = vector.load %arg1[%c0_3, %c0_4] : memref<32x128xf32, #tpu.memory_space<vmem>>, vector<32x128xf32>
    %c0_5 = arith.constant 0 : index
    %c256 = arith.constant 256 : index
    %4 = vector.load %arg6[%c0_5, %c256] : memref<32x512xf32, #tpu.memory_space<vmem>>, vector<32x128xf32>
    tpu.vector_store %arg6[%c0_5, %c256], %3 {strides = array<i32>} : memref<32x512xf32, #tpu.memory_space<vmem>>, vector<32x128xf32>,
    %c0_6 = arith.constant 0 : index
    %c128 = arith.constant 128 : index
    %5 = vector.load %arg6[%c0_6, %c128] : memref<32x512xf32, #tpu.memory_space<vmem>>, vector<1x128xf32>
    tpu.vector_store %arg6[%c0_6, %c128], %0 {strides = array<i32>} : memref<32x512xf32, #tpu.memory_space<vmem>>, vector<1x128xf32>,
    %c0_7 = arith.constant 0 : index
    %c0_8 = arith.constant 0 : index
    %6 = vector.load %arg1[%c0_7, %c0_8] : memref<32x128xf32, #tpu.memory_space<vmem>>, vector<15x128xf32>
    %c1 = arith.constant 1 : index
    %c128_9 = arith.constant 128 : index
    %7 = vector.load %arg6[%c1, %c128_9] : memref<32x512xf32, #tpu.memory_space<vmem>>, vector<15x128xf32>
    tpu.vector_store %arg6[%c1, %c128_9], %6 {strides = array<i32>} : memref<32x512xf32, #tpu.memory_space<vmem>>, vector<15x128xf32>,
    %c1_10 = arith.constant 1 : index
    %c0_11 = arith.constant 0 : index
    %8 = vector.load %arg1[%c1_10, %c0_11] : memref<32x128xf32, #tpu.memory_space<vmem>>, vector<15x128xf32>
    %c0_12 = arith.constant 0 : index
    %c384 = arith.constant 384 : index
    %9 = vector.load %arg6[%c0_12, %c384] : memref<32x512xf32, #tpu.memory_space<vmem>>, vector<15x128xf32>
    tpu.vector_store %arg6[%c0_12, %c384], %8 {strides = array<i32>} : memref<32x512xf32, #tpu.memory_space<vmem>>, vector<15x128xf32>,
    %c15 = arith.constant 15 : index
    %c384_13 = arith.constant 384 : index
    %10 = vector.load %arg6[%c15, %c384_13] : memref<32x512xf32, #tpu.memory_space<vmem>>, vector<1x128xf32>
    tpu.vector_store %arg6[%c15, %c384_13], %0 {strides = array<i32>} : memref<32x512xf32, #tpu.memory_space<vmem>>, vector<1x128xf32>,
    %c16 = arith.constant 16 : index
    %c128_14 = arith.constant 128 : index
    %11 = vector.load %arg6[%c16, %c128_14] : memref<32x512xf32, #tpu.memory_space<vmem>>, vector<1x128xf32>
    tpu.vector_store %arg6[%c16, %c128_14], %0 {strides = array<i32>} : memref<32x512xf32, #tpu.memory_space<vmem>>, vector<1x128xf32>,
    %c16_15 = arith.constant 16 : index
    %c0_16 = arith.constant 0 : index
    %12 = vector.load %arg1[%c16_15, %c0_16] : memref<32x128xf32, #tpu.memory_space<vmem>>, vector<15x128xf32>
    %c17 = arith.constant 17 : index
    %c128_17 = arith.constant 128 : index
    %13 = vector.load %arg6[%c17, %c128_17] : memref<32x512xf32, #tpu.memory_space<vmem>>, vector<15x128xf32>
    tpu.vector_store %arg6[%c17, %c128_17], %12 {strides = array<i32>} : memref<32x512xf32, #tpu.memory_space<vmem>>, vector<15x128xf32>,
    %c17_18 = arith.constant 17 : index
    %c0_19 = arith.constant 0 : index
    %14 = vector.load %arg1[%c17_18, %c0_19] : memref<32x128xf32, #tpu.memory_space<vmem>>, vector<15x128xf32>
    %c16_20 = arith.constant 16 : index
    %c384_21 = arith.constant 384 : index
    %15 = vector.load %arg6[%c16_20, %c384_21] : memref<32x512xf32, #tpu.memory_space<vmem>>, vector<15x128xf32>
    tpu.vector_store %arg6[%c16_20, %c384_21], %14 {strides = array<i32>} : memref<32x512xf32, #tpu.memory_space<vmem>>, vector<15x128xf32>,
    %c31 = arith.constant 31 : index
    %c384_22 = arith.constant 384 : index
    %16 = vector.load %arg6[%c31, %c384_22] : memref<32x512xf32, #tpu.memory_space<vmem>>, vector<1x128xf32>
    tpu.vector_store %arg6[%c31, %c384_22], %0 {strides = array<i32>} : memref<32x512xf32, #tpu.memory_space<vmem>>, vector<1x128xf32>,
    %c0_23 = arith.constant 0 : index
    %c0_24 = arith.constant 0 : index
    %17 = vector.load %arg6[%c0_23, %c0_24] : memref<32x512xf32, #tpu.memory_space<vmem>>, vector<32x512xf32>
    %18 = arith.truncf %17 : vector<32x512xf32> to vector<32x512xbf16>
    %c0_25 = arith.constant 0 : index
    %c0_26 = arith.constant 0 : index
    %19 = vector.load %arg3[%c0_25, %c0_26] : memref<512x128xbf16, #tpu.memory_space<vmem>>, vector<512x128xbf16>
    %cst_27 = arith.constant dense<0.000000e+00> : vector<32x128xf32>
    %20 = tpu.matmul %18, %19, %cst_27 {dimension_numbers = #tpu.dot_dimension_numbers<[1], [0], [0], [1], [0, 0, 1, 1], [], []>} : vector<32x512xbf16>, vector<512x128xbf16>, vector<32x128xf32> -> vector<32x128xf32>
    %c0_28 = arith.constant 0 : index
    %c0_29 = arith.constant 0 : index
    %21 = vector.load %arg4[%c0_28, %c0_29] : memref<1x128xf32, #tpu.memory_space<vmem>>, vector<1x128xf32>
    %22 = vector.broadcast %21 : vector<1x128xf32> to vector<32x128xf32>
    %23 = arith.addf %20, %22 : vector<32x128xf32>
    %c0_30 = arith.constant 0 : index
    %c0_31 = arith.constant 0 : index
    %24 = vector.load %arg5[%c0_30, %c0_31] : memref<32x128xf32, #tpu.memory_space<vmem>>, vector<32x128xf32>
    tpu.vector_store %arg5[%c0_30, %c0_31], %23 {strides = array<i32>} : memref<32x128xf32, #tpu.memory_space<vmem>>, vector<32x128xf32>,
    return
  }
  func.func @transform_0(%arg0: i32) -> (i32, i32) {
    %c0_i32 = arith.constant 0 : i32
    %c0_i32_0 = arith.constant 0 : i32
    return %arg0, %c0_i32 : i32, i32
  }
  func.func @transform_1(%arg0: i32) -> (i32, i32) {
    %c0_i32 = arith.constant 0 : i32
    %c0_i32_0 = arith.constant 0 : i32
    return %arg0, %c0_i32 : i32, i32
  }
  func.func @transform_2(%arg0: i32) -> (i32, i32) {
    %c0_i32 = arith.constant 0 : i32
    %c0_i32_0 = arith.constant 0 : i32
    %c0_i32_1 = arith.constant 0 : i32
    return %c0_i32, %c0_i32_0 : i32, i32
  }
  func.func @transform_3(%arg0: i32) -> (i32, i32) {
    %c0_i32 = arith.constant 0 : i32
    %c0_i32_0 = arith.constant 0 : i32
    %c0_i32_1 = arith.constant 0 : i32
    return %c0_i32, %c0_i32_0 : i32, i32
  }
  func.func @transform_4(%arg0: i32) -> (i32, i32) {
    %c0_i32 = arith.constant 0 : i32
    %c0_i32_0 = arith.constant 0 : i32
    return %arg0, %c0_i32 : i32, i32
  }
}

</mosaic_0001>

<llo_original>
// kernel: tpu_custom_call.1
$region0: #{tpu_custom_call.1}
  #allocation0 [shape = 'u32[]', space=smem, size = 0x4, offset = 0x4, fixed_abs, tag = 'smem constant byte address 0x4 - core index']
  #allocation1 [shape = 'u32[144,128]{1,0:T(1,128)}', space=vmem, size = 0x12000, scoped, tag = 'internal scratch']
  #allocation2 [shape = 'f32[32,512]{1,0:T(8,128)}', space=vmem, size = 0x10000, scoped, tag = 'scratch operand']
  %s0 = inlined_call_operand.hbm [shape: f32[32,128], index: 0, kind: input, shape index: {}]
  %s1 = inlined_call_operand.hbm [shape: f32[32,128], index: 1, kind: input, shape index: {}]
  %s2 = inlined_call_operand.hbm [shape: bf16[512,128], index: 2, kind: input, shape index: {}]
  %s3 = inlined_call_operand.vmem [shape: f32[1,128], index: 3, kind: input, shape index: {}]
  %s4 = inlined_call_operand.hbm [shape: f32[32,128], index: 4, kind: output, shape index: {}]
  %s5 = sld [smem:[#allocation0]]
  $region38: #{tpu_custom_call.1} parent=0
    _
  %s7 = ssub.s32 1, %s5
  %s8 = scalar_select 0, %s7, %s5
  $region1: #{tpu_custom_call.1} parent=0
    #allocation3 [shape = 'u8[16384]{0}', space=vmem, size = 0x4000, scoped, tag = 'input window, operand 0, single buffered']
    #allocation4 [shape = 's32[1]{0}', space=sflag, size = 0x4, scoped, tag = 'scoped memory for tpu_custom_call.1']
    #allocation5 [shape = 's32[1]{0}', space=sflag, size = 0x4, scoped, tag = 'scoped memory for tpu_custom_call.1']
    #allocation6 [shape = 'u8[16384]{0}', space=vmem, size = 0x4000, scoped, tag = 'input window, operand 1, single buffered']
    #allocation7 [shape = 's32[1]{0}', space=sflag, size = 0x4, scoped, tag = 'scoped memory for tpu_custom_call.1']
    #allocation8 [shape = 'u8[131072]{0}', space=vmem, size = 0x20000, scoped, tag = 'input window, operand 2, single buffered']
    #allocation9 [shape = 'u8[16384]{0}', space=vmem, size = 0x4000, scoped, tag = 'output window, operand 0, single buffered']
    %9 = vsyncpa [#allocation4], 0
    %10 = vsyncpa [#allocation7], 0
    %11 = vsyncpa [#allocation5], 0
    // Predicated region
    $region2: #{tpu_custom_call.1} parent=1 // pred_check
      _
    $region3: #{tpu_custom_call.1} parent=1 // pred_check_branch
      %13 = sbr.rel (0) target = $region5
    $region4: #{tpu_custom_call.1} parent=1 // pred_region
      %s15 = ssub.s32 512, 512
      %16 = vsyncadd [#allocation4], %s15
      %s17 = sshll.u32 [#allocation3], 4
      %s18 = int_to_ptr.vmem [resolvable:$true] %s17
      %23 = dma.hbm_to_vmem [thread:$0]  %s0, 512, %s18, [#allocation4], 128, 128, 8
    $region5: #{tpu_custom_call.1} parent=1 // pred_fallthru
      _
    // Predicated region
    $region6: #{tpu_custom_call.1} parent=1 // pred_check
      _
    $region7: #{tpu_custom_call.1} parent=1 // pred_check_branch
      %25 = sbr.rel (0) target = $region9
    $region8: #{tpu_custom_call.1} parent=1 // pred_region
      %s27 = ssub.s32 512, 512
      %28 = vsyncadd [#allocation7], %s27
      %s29 = sshll.u32 [#allocation6], 4
      %s30 = int_to_ptr.vmem [resolvable:$true] %s29
      %35 = dma.hbm_to_vmem [thread:$0]  %s1, 512, %s30, [#allocation7], 128, 128, 8
    $region9: #{tpu_custom_call.1} parent=1 // pred_fallthru
      _
    // Predicated region
    $region10: #{tpu_custom_call.1} parent=1 // pred_check
      _
    $region11: #{tpu_custom_call.1} parent=1 // pred_check_branch
      %37 = sbr.rel (0) target = $region13
    $region12: #{tpu_custom_call.1} parent=1 // pred_region
      %s39 = ssub.s32 4096, 4096
      %40 = vsyncadd [#allocation7], %s39
      %s41 = sshll.u32 [#allocation8], 4
      %s42 = int_to_ptr.vmem [resolvable:$true] %s41
      %47 = dma.hbm_to_vmem [thread:$0]  %s2, 4096, %s42, [#allocation7], 64, 64, 4
    $region13: #{tpu_custom_call.1} parent=1 // pred_fallthru
      _
    // Predicated region
    $region14: #{tpu_custom_call.1} parent=1 // pred_check
      _
    $region15: #{tpu_custom_call.1} parent=1 // pred_check_branch
      %49 = sbr.rel (0) target = $region17
    $region16: #{tpu_custom_call.1} parent=1 // pred_region
      _
    $region17: #{tpu_custom_call.1} parent=1 // pred_fallthru
      _
    // Predicated region
    $region18: #{tpu_custom_call.1} parent=1 // pred_check
      _
    $region19: #{tpu_custom_call.1} parent=1 // pred_check_branch
      %51 = sbr.rel (0) target = $region21
    $region20: #{tpu_custom_call.1} parent=1 // pred_region
      %52 = dma.done [#allocation4], 512
    $region21: #{tpu_custom_call.1} parent=1 // pred_fallthru
      _
    // Predicated region
    $region22: #{tpu_custom_call.1} parent=1 // pred_check
      _
    $region23: #{tpu_custom_call.1} parent=1 // pred_check_branch
      %54 = sbr.rel (0) target = $region25
    $region24: #{tpu_custom_call.1} parent=1 // pred_region
      %55 = dma.done [#allocation7], 512
    $region25: #{tpu_custom_call.1} parent=1 // pred_fallthru
      _
    // Predicated region
    $region26: #{tpu_custom_call.1} parent=1 // pred_check
      _
    $region27: #{tpu_custom_call.1} parent=1 // pred_check_branch
      %57 = sbr.rel (0) target = $region29
    $region28: #{tpu_custom_call.1} parent=1 // pred_region
      %58 = dma.done [#allocation7], 4096
    $region29: #{tpu_custom_call.1} parent=1 // pred_fallthru
      _
    %v60 = vld [vmem:[#allocation6] sm:$0xff]
    %v61 = vld [vmem:[#allocation6 + $0x8] sm:$0xff]
    %v62 = vld [vmem:[#allocation6 + $0x10] sm:$0xff]
    %v63 = vld [vmem:[#allocation6 + $0x18] sm:$0xff]
    %64 = vst [vmem:[#allocation2] sm:$0xff] %v60
    %65 = vst [vmem:[#allocation2 + $0x20] sm:$0xff] %v61
    %66 = vst [vmem:[#allocation2 + $0x40] sm:$0xff] %v62
    %67 = vst [vmem:[#allocation2 + $0x60] sm:$0xff] %v63
    %v68 = vld [vmem:[#allocation3] sm:$0xff]
    %v69 = vld [vmem:[#allocation3 + $0x8] sm:$0xff]
    %v70 = vld [vmem:[#allocation3 + $0x10] sm:$0xff]
    %v71 = vld [vmem:[#allocation3 + $0x18] sm:$0xff]
    %72 = vst [vmem:[#allocation2 + $0x10] sm:$0xff] %v68
    %73 = vst [vmem:[#allocation2 + $0x30] sm:$0xff] %v69
    %74 = vst [vmem:[#allocation2 + $0x50] sm:$0xff] %v70
    %75 = vst [vmem:[#allocation2 + $0x70] sm:$0xff] %v71
    %76 = vst [vmem:[#allocation2 + $0x8] sm:$0x1] 0.0
    %v77 = vld [vmem:[#allocation3] sm:$0xff]
    %v78 = vld [vmem:[#allocation3 + $0x8] sm:$0x7f]
    %vm81 = vcmask 1040384
    %v82 = vrot.slane %v77, 7
    %v83 = vrot.slane %v78, 7
    %v84 = vsel %vm81, %v82, %v83
    %87 = vst [vmem:[#allocation2 + $0x8] sm:$0xfe] %v82
    %88 = vst [vmem:[#allocation2 + $0x28] sm:$0xff] %v84
    %v89 = vld [vmem:[#allocation3 + $0x1] sm:$0xff]
    %v90 = vld [vmem:[#allocation3 + $0x9] sm:$0x7f]
    %91 = vst [vmem:[#allocation2 + $0x18] sm:$0xff] %v89
    %92 = vst [vmem:[#allocation2 + $0x38] sm:$0x7f] %v90
    %93 = vst [vmem:[#allocation2 + $0x3f] sm:$0x1] 0.0
    %94 = vst [vmem:[#allocation2 + $0x48] sm:$0x1] 0.0
    %v95 = vld [vmem:[#allocation3 + $0x10] sm:$0xff]
    %v96 = vld [vmem:[#allocation3 + $0x18] sm:$0x7f]
    %v99 = vrot.slane %v95, 7
    %v100 = vrot.slane %v96, 7
    %v101 = vsel %vm81, %v99, %v100
    %104 = vst [vmem:[#allocation2 + $0x48] sm:$0xfe] %v99
    %105 = vst [vmem:[#allocation2 + $0x68] sm:$0xff] %v101
    %v106 = vld [vmem:[#allocation3 + $0x11] sm:$0xff]
    %v107 = vld [vmem:[#allocation3 + $0x19] sm:$0x7f]
    %108 = vst [vmem:[#allocation2 + $0x58] sm:$0xff] %v106
    %109 = vst [vmem:[#allocation2 + $0x78] sm:$0x7f] %v107
    %110 = vst [vmem:[#allocation2 + $0x7f] sm:$0x1] 0.0
    %v111 = vld [vmem:[#allocation2] sm:$0xff]
    %v112 = vld [vmem:[#allocation2 + $0x8] sm:$0xff]
    %v113 = vld [vmem:[#allocation2 + $0x10] sm:$0xff]
    %v114 = vld [vmem:[#allocation2 + $0x18] sm:$0xff]
    %v115 = vld [vmem:[#allocation2 + $0x20] sm:$0xff]
    %v116 = vld [vmem:[#allocation2 + $0x28] sm:$0xff]
    %v117 = vld [vmem:[#allocation2 + $0x30] sm:$0xff]
    %v118 = vld [vmem:[#allocation2 + $0x38] sm:$0xff]
    %v119 = vld [vmem:[#allocation2 + $0x40] sm:$0xff]
    %v120 = vld [vmem:[#allocation2 + $0x48] sm:$0xff]
    %v121 = vld [vmem:[#allocation2 + $0x50] sm:$0xff]
    %v122 = vld [vmem:[#allocation2 + $0x58] sm:$0xff]
    %v123 = vld [vmem:[#allocation2 + $0x60] sm:$0xff]
    %v124 = vld [vmem:[#allocation2 + $0x68] sm:$0xff]
    %v125 = vld [vmem:[#allocation2 + $0x70] sm:$0xff]
    %v126 = vld [vmem:[#allocation2 + $0x78] sm:$0xff]
    %v127 = vpack.c.bf16 %v115, %v111
    %v128 = vpack.c.bf16 %v116, %v112
    %v129 = vpack.c.bf16 %v117, %v113
    %v130 = vpack.c.bf16 %v118, %v114
    %v131 = vpack.c.bf16 %v123, %v119
    %v132 = vpack.c.bf16 %v124, %v120
    %v133 = vpack.c.bf16 %v125, %v121
    %v134 = vpack.c.bf16 %v126, %v122
    %v135 = vld [vmem:[#allocation8] sm:$0xf]
    %v136 = vld [vmem:[#allocation8 + $0x4] sm:$0xf]
    %v137 = vld [vmem:[#allocation8 + $0x8] sm:$0xf]
    %v138 = vld [vmem:[#allocation8 + $0xc] sm:$0xf]
    %v139 = vld [vmem:[#allocation8 + $0x10] sm:$0xf]
    %v140 = vld [vmem:[#allocation8 + $0x14] sm:$0xf]
    %v141 = vld [vmem:[#allocation8 + $0x18] sm:$0xf]
    %v142 = vld [vmem:[#allocation8 + $0x1c] sm:$0xf]
    %v143 = vld [vmem:[#allocation8 + $0x20] sm:$0xf]
    %v144 = vld [vmem:[#allocation8 + $0x24] sm:$0xf]
    %v145 = vld [vmem:[#allocation8 + $0x28] sm:$0xf]
    %v146 = vld [vmem:[#allocation8 + $0x2c] sm:$0xf]
    %v147 = vld [vmem:[#allocation8 + $0x30] sm:$0xf]
    %v148 = vld [vmem:[#allocation8 + $0x34] sm:$0xf]
    %v149 = vld [vmem:[#allocation8 + $0x38] sm:$0xf]
    %v150 = vld [vmem:[#allocation8 + $0x3c] sm:$0xf]
    %v151 = vld [vmem:[#allocation8 + $0x40] sm:$0xf]
    %v152 = vld [vmem:[#allocation8 + $0x44] sm:$0xf]
    %v153 = vld [vmem:[#allocation8 + $0x48] sm:$0xf]
    %v154 = vld [vmem:[#allocation8 + $0x4c] sm:$0xf]
    %v155 = vld [vmem:[#allocation8 + $0x50] sm:$0xf]
    %v156 = vld [vmem:[#allocation8 + $0x54] sm:$0xf]
    %v157 = vld [vmem:[#allocation8 + $0x58] sm:$0xf]
    %v158 = vld [vmem:[#allocation8 + $0x5c] sm:$0xf]
    %v159 = vld [vmem:[#allocation8 + $0x60] sm:$0xf]
    %v160 = vld [vmem:[#allocation8 + $0x64] sm:$0xf]
    %v161 = vld [vmem:[#allocation8 + $0x68] sm:$0xf]
    %v162 = vld [vmem:[#allocation8 + $0x6c] sm:$0xf]
    %v163 = vld [vmem:[#allocation8 + $0x70] sm:$0xf]
    %v164 = vld [vmem:[#allocation8 + $0x74] sm:$0xf]
    %v165 = vld [vmem:[#allocation8 + $0x78] sm:$0xf]
    %v166 = vld [vmem:[#allocation8 + $0x7c] sm:$0xf]
    %v167 = vld [vmem:[#allocation8 + $0x80] sm:$0xf]
    %v168 = vld [vmem:[#allocation8 + $0x84] sm:$0xf]
    %v169 = vld [vmem:[#allocation8 + $0x88] sm:$0xf]
    %v170 = vld [vmem:[#allocation8 + $0x8c] sm:$0xf]
    %v171 = vld [vmem:[#allocation8 + $0x90] sm:$0xf]
    %v172 = vld [vmem:[#allocation8 + $0x94] sm:$0xf]
    %v173 = vld [vmem:[#allocation8 + $0x98] sm:$0xf]
    %v174 = vld [vmem:[#allocation8 + $0x9c] sm:$0xf]
    %v175 = vld [vmem:[#allocation8 + $0xa0] sm:$0xf]
    %v176 = vld [vmem:[#allocation8 + $0xa4] sm:$0xf]
    %v177 = vld [vmem:[#allocation8 + $0xa8] sm:$0xf]
    %v178 = vld [vmem:[#allocation8 + $0xac] sm:$0xf]
    %v179 = vld [vmem:[#allocation8 + $0xb0] sm:$0xf]
    %v180 = vld [vmem:[#allocation8 + $0xb4] sm:$0xf]
    %v181 = vld [vmem:[#allocation8 + $0xb8] sm:$0xf]
    %v182 = vld [vmem:[#allocation8 + $0xbc] sm:$0xf]
    %v183 = vld [vmem:[#allocation8 + $0xc0] sm:$0xf]
    %v184 = vld [vmem:[#allocation8 + $0xc4] sm:$0xf]
    %v185 = vld [vmem:[#allocation8 + $0xc8] sm:$0xf]
    %v186 = vld [vmem:[#allocation8 + $0xcc] sm:$0xf]
    %v187 = vld [vmem:[#allocation8 + $0xd0] sm:$0xf]
    %v188 = vld [vmem:[#allocation8 + $0xd4] sm:$0xf]
    %v189 = vld [vmem:[#allocation8 + $0xd8] sm:$0xf]
    %v190 = vld [vmem:[#allocation8 + $0xdc] sm:$0xf]
    %v191 = vld [vmem:[#allocation8 + $0xe0] sm:$0xf]
    %v192 = vld [vmem:[#allocation8 + $0xe4] sm:$0xf]
    %v193 = vld [vmem:[#allocation8 + $0xe8] sm:$0xf]
    %v194 = vld [vmem:[#allocation8 + $0xec] sm:$0xf]
    %v195 = vld [vmem:[#allocation8 + $0xf0] sm:$0xf]
    %v196 = vld [vmem:[#allocation8 + $0xf4] sm:$0xf]
    %v197 = vld [vmem:[#allocation8 + $0xf8] sm:$0xf]
    %v198 = vld [vmem:[#allocation8 + $0xfc] sm:$0xf]
    %v199 = vld [vmem:[%s3] sm:$0x1]
    %v201 = vlaneseq
    %v202 = vshrl.u32 %v201, 7
    %v203 = vsub.s32 0, %v202
    %v204 = vrot.slane %v199, %v203
    %v270 = vunpack.c.l.b16 %v135
    %v271 = vunpack.c.l.b16 %v136
    %v272 = vunpack.c.l.b16 %v137
    %v273 = vunpack.c.l.b16 %v138
    %v274 = vunpack.c.l.b16 %v139
    %v275 = vunpack.c.l.b16 %v140
    %v276 = vunpack.c.l.b16 %v141
    %v277 = vunpack.c.l.b16 %v142
    %v278 = vunpack.c.l.b16 %v143
    %v279 = vunpack.c.l.b16 %v144
    %v280 = vunpack.c.l.b16 %v145
    %v281 = vunpack.c.l.b16 %v146
    %v282 = vunpack.c.l.b16 %v147
    %v283 = vunpack.c.l.b16 %v148
    %v284 = vunpack.c.l.b16 %v149
    %v285 = vunpack.c.l.b16 %v150
    %v286 = vunpack.c.l.b16 %v151
    %v287 = vunpack.c.l.b16 %v152
    %v288 = vunpack.c.l.b16 %v153
    %v289 = vunpack.c.l.b16 %v154
    %v290 = vunpack.c.l.b16 %v155
    %v291 = vunpack.c.l.b16 %v156
    %v292 = vunpack.c.l.b16 %v157
    %v293 = vunpack.c.l.b16 %v158
    %v294 = vunpack.c.l.b16 %v159
    %v295 = vunpack.c.l.b16 %v160
    %v296 = vunpack.c.l.b16 %v161
    %v297 = vunpack.c.l.b16 %v162
    %v298 = vunpack.c.l.b16 %v163
    %v299 = vunpack.c.l.b16 %v164
    %v300 = vunpack.c.l.b16 %v165
    %v301 = vunpack.c.l.b16 %v166
    %v302 = vunpack.c.l.b16 %v167
    %v303 = vunpack.c.l.b16 %v168
    %v304 = vunpack.c.l.b16 %v169
    %v305 = vunpack.c.l.b16 %v170
    %v306 = vunpack.c.l.b16 %v171
    %v307 = vunpack.c.l.b16 %v172
    %v308 = vunpack.c.l.b16 %v173
    %v309 = vunpack.c.l.b16 %v174
    %v310 = vunpack.c.l.b16 %v175
    %v311 = vunpack.c.l.b16 %v176
    %v312 = vunpack.c.l.b16 %v177
    %v313 = vunpack.c.l.b16 %v178
    %v314 = vunpack.c.l.b16 %v179
    %v315 = vunpack.c.l.b16 %v180
    %v316 = vunpack.c.l.b16 %v181
    %v317 = vunpack.c.l.b16 %v182
    %v318 = vunpack.c.l.b16 %v183
    %v319 = vunpack.c.l.b16 %v184
    %v320 = vunpack.c.l.b16 %v185
    %v321 = vunpack.c.l.b16 %v186
    %v322 = vunpack.c.l.b16 %v187
    %v323 = vunpack.c.l.b16 %v188
    %v324 = vunpack.c.l.b16 %v189
    %v325 = vunpack.c.l.b16 %v190
    %v326 = vunpack.c.l.b16 %v191
    %v327 = vunpack.c.l.b16 %v192
    %v328 = vunpack.c.l.b16 %v193
    %v329 = vunpack.c.l.b16 %v194
    %v330 = vunpack.c.l.b16 %v195
    %v331 = vunpack.c.l.b16 %v196
    %v332 = vunpack.c.l.b16 %v197
    %v333 = vunpack.c.l.b16 %v198
    %v334 = vpack.c.b16 %v271, %v270
    %v335 = vpack.c.b16 %v273, %v272
    %v336 = vpack.c.b16 %v275, %v274
    %v337 = vpack.c.b16 %v277, %v276
    %v338 = vpack.c.b16 %v279, %v278
    %v339 = vpack.c.b16 %v281, %v280
    %v340 = vpack.c.b16 %v283, %v282
    %v341 = vpack.c.b16 %v285, %v284
    %v342 = vpack.c.b16 %v287, %v286
    %v343 = vpack.c.b16 %v289, %v288
    %v344 = vpack.c.b16 %v291, %v290
    %v345 = vpack.c.b16 %v293, %v292
    %v346 = vpack.c.b16 %v295, %v294
    %v347 = vpack.c.b16 %v297, %v296
    %v348 = vpack.c.b16 %v299, %v298
    %v349 = vpack.c.b16 %v301, %v300
    %v350 = vpack.c.b16 %v303, %v302
    %v351 = vpack.c.b16 %v305, %v304
    %v352 = vpack.c.b16 %v307, %v306
    %v353 = vpack.c.b16 %v309, %v308
    %v354 = vpack.c.b16 %v311, %v310
    %v355 = vpack.c.b16 %v313, %v312
    %v356 = vpack.c.b16 %v315, %v314
    %v357 = vpack.c.b16 %v317, %v316
    %v358 = vpack.c.b16 %v319, %v318
    %v359 = vpack.c.b16 %v321, %v320
    %v360 = vpack.c.b16 %v323, %v322
    %v361 = vpack.c.b16 %v325, %v324
    %v362 = vpack.c.b16 %v327, %v326
    %v363 = vpack.c.b16 %v329, %v328
    %v364 = vpack.c.b16 %v331, %v330
    %v365 = vpack.c.b16 %v333, %v332
    %398 = vmatprep.subr.bf16.mxu0 0
    %399 = vmatpush1.bf16.msra.mxu0 %v334
    %400 = vmatprep.subr.bf16.mxu0 0
    %401 = vmatpush1.bf16.msra.mxu0 %v335
    %402 = vmatprep.subr.bf16.mxu0 0
    %403 = vmatpush1.bf16.msra.mxu0 %v336
    %404 = vmatprep.subr.bf16.mxu0 0
    %405 = vmatpush1.bf16.msra.mxu0 %v337
    %406 = vmatprep.subr.bf16.mxu0 0
    %407 = vmatpush1.bf16.msra.mxu0 %v338
    %408 = vmatprep.subr.bf16.mxu0 0
    %409 = vmatpush1.bf16.msra.mxu0 %v339
    %410 = vmatprep.subr.bf16.mxu0 0
    %411 = vmatpush1.bf16.msra.mxu0 %v340
    %412 = vmatprep.subr.bf16.mxu0 0
    %413 = vmatpush1.bf16.msra.mxu0 %v341
    %414 = vmatprep.subr.bf16.mxu0 0
    %415 = vmatpush1.bf16.msra.mxu0 %v342
    %416 = vmatprep.subr.bf16.mxu0 0
    %417 = vmatpush1.bf16.msra.mxu0 %v343
    %418 = vmatprep.subr.bf16.mxu0 0
    %419 = vmatpush1.bf16.msra.mxu0 %v344
    %420 = vmatprep.subr.bf16.mxu0 0
    %421 = vmatpush1.bf16.msra.mxu0 %v345
    %422 = vmatprep.subr.bf16.mxu0 0
    %423 = vmatpush1.bf16.msra.mxu0 %v346
    %424 = vmatprep.subr.bf16.mxu0 0
    %425 = vmatpush1.bf16.msra.mxu0 %v347
    %426 = vmatprep.subr.bf16.mxu0 0
    %427 = vmatpush1.bf16.msra.mxu0 %v348
    %428 = vmatprep.subr.bf16.mxu0 0
    %429 = vmatpush1.bf16.msra.mxu0 %v349
    %430 = vmatprep.mubr.bf16.mxu0 %v128
    %431 = vmatmul.mubr.bf16.gmra.mrb[0].mxu0 %v127
    %v432 = vpop.f32.mrb[0].mxu0
    %v433 = vadd.f32 %v204, %v432
    %v434 = vpop.f32.mrb[0].mxu0
    %v435 = vpop.f32.mrb[0].mxu0
    %v436 = vadd.f32 %v204, %v435
    %v437 = vpop.f32.mrb[0].mxu0
    %438 = vmatprep.mubr.bf16.mxu0 %v132
    %439 = vmatmul.mubr.bf16.gmra.mrb[0].mxu0 %v131
    %v440 = vpop.f32.mrb[0].mxu0
    %v441 = vadd.f32 %v204, %v440
    %v442 = vpop.f32.mrb[0].mxu0
    %v443 = vpop.f32.mrb[0].mxu0
    %v444 = vadd.f32 %v204, %v443
    %v445 = vpop.f32.mrb[0].mxu0
    %446 = vdwg.mxu0
    %447 = vmatprep.subr.bf16.mxu0 0
    %448 = vmatpush1.bf16.msra.mxu0 %v350
    %449 = vmatprep.subr.bf16.mxu0 0
    %450 = vmatpush1.bf16.msra.mxu0 %v351
    %451 = vmatprep.subr.bf16.mxu0 0
    %452 = vmatpush1.bf16.msra.mxu0 %v352
    %453 = vmatprep.subr.bf16.mxu0 0
    %454 = vmatpush1.bf16.msra.mxu0 %v353
    %455 = vmatprep.subr.bf16.mxu0 0
    %456 = vmatpush1.bf16.msra.mxu0 %v354
    %457 = vmatprep.subr.bf16.mxu0 0
    %458 = vmatpush1.bf16.msra.mxu0 %v355
    %459 = vmatprep.subr.bf16.mxu0 0
    %460 = vmatpush1.bf16.msra.mxu0 %v356
    %461 = vmatprep.subr.bf16.mxu0 0
    %462 = vmatpush1.bf16.msra.mxu0 %v357
    %463 = vmatprep.subr.bf16.mxu0 0
    %464 = vmatpush1.bf16.msra.mxu0 %v358
    %465 = vmatprep.subr.bf16.mxu0 0
    %466 = vmatpush1.bf16.msra.mxu0 %v359
    %467 = vmatprep.subr.bf16.mxu0 0
    %468 = vmatpush1.bf16.msra.mxu0 %v360
    %469 = vmatprep.subr.bf16.mxu0 0
    %470 = vmatpush1.bf16.msra.mxu0 %v361
    %471 = vmatprep.subr.bf16.mxu0 0
    %472 = vmatpush1.bf16.msra.mxu0 %v362
    %473 = vmatprep.subr.bf16.mxu0 0
    %474 = vmatpush1.bf16.msra.mxu0 %v363
    %475 = vmatprep.subr.bf16.mxu0 0
    %476 = vmatpush1.bf16.msra.mxu0 %v364
    %477 = vmatprep.subr.bf16.mxu0 0
    %478 = vmatpush1.bf16.msra.mxu0 %v365
    %479 = vmatprep.mubr.bf16.mxu0 %v130
    %480 = vmatmul.mubr.bf16.gmra.mrb[0].mxu0 %v129
    %v481 = vpop.f32.mrb[0].mxu0
    %v482 = vadd.f32 %v433, %v481
    %v483 = vpop.f32.mrb[0].mxu0
    %v484 = vpop.f32.mrb[0].mxu0
    %v485 = vadd.f32 %v436, %v484
    %v486 = vpop.f32.mrb[0].mxu0
    %487 = vmatprep.mubr.bf16.mxu0 %v134
    %488 = vmatmul.mubr.bf16.gmra.mrb[0].mxu0 %v133
    %v489 = vpop.f32.mrb[0].mxu0
    %v490 = vadd.f32 %v441, %v489
    %v491 = vpop.f32.mrb[0].mxu0
    %v492 = vpop.f32.mrb[0].mxu0
    %v493 = vadd.f32 %v444, %v492
    %v494 = vpop.f32.mrb[0].mxu0
    %495 = vdwg.mxu0
    %496 = vst [vmem:[#allocation9] sm:$0xff] %v482
    %497 = vst [vmem:[#allocation9 + $0x8] sm:$0xff] %v485
    %498 = vst [vmem:[#allocation9 + $0x10] sm:$0xff] %v490
    %499 = vst [vmem:[#allocation9 + $0x18] sm:$0xff] %v493
    // Predicated region
    $region30: #{tpu_custom_call.1} parent=1 // pred_check
      _
    $region31: #{tpu_custom_call.1} parent=1 // pred_check_branch
      %501 = sbr.rel (0) target = $region33
    $region32: #{tpu_custom_call.1} parent=1 // pred_region
      %s503 = ssub.s32 512, 512
      %504 = vsyncadd [#allocation5], %s503
      %s505 = sshll.u32 [#allocation9], 4
      %s506 = int_to_ptr.vmem [resolvable:$true] %s505
      %511 = dma.vmem_to_hbm [thread:$0]  %s506, 512, %s4, [#allocation5], 128, 128, 8
    $region33: #{tpu_custom_call.1} parent=1 // pred_fallthru
      _
    // Predicated region
    $region34: #{tpu_custom_call.1} parent=1 // pred_check
      _
    $region35: #{tpu_custom_call.1} parent=1 // pred_check_branch
      %513 = sbr.rel (0) target = $region37
    $region36: #{tpu_custom_call.1} parent=1 // pred_region
      %514 = dma.done [#allocation5], 512
    $region37: #{tpu_custom_call.1} parent=1 // pred_fallthru
      _
    %515 = vsyncpa [#allocation4], 1
    %516 = vsyncpa [#allocation7], 1
    %517 = vsyncpa [#allocation5], 1

</llo_original>
